<compile_context>
chip_gen: v7x
topology: tpu7x:2x2x1
jax: 0.10.0
libtpu: 0.0.40
codegen_flags: <defaults>
</compile_context>

<pallas_src>
import functools

import jax
import jax.numpy as jnp
from jax.experimental import pallas as pl
from jax.experimental.pallas import tpu as pltpu


def _round_up(n, m):
    return ((n + m - 1) // m) * m


# ---------------------------------------------------------------------------
# Kernel
# ---------------------------------------------------------------------------
def autoencoder_kernel(x_ref,
                       w1_ref, b1_ref,   # enc Linear 1: (D,  Hp), (1, Hp)
                       w2_ref, b2_ref,   # enc Linear 2: (Hp, Lp), (1, Lp)
                       w3_ref, b3_ref,   # dec Linear 1: (Lp, Hp), (1, Hp)
                       w4_ref, b4_ref,   # dec Linear 2: (Hp, D ), (1, D )
                       out_ref):
    cdt = w1_ref.dtype                   # MXU operand dtype (f32 or bf16)
    x = x_ref[...].astype(cdt)           # in-VMEM cast; no extra HBM pass

    # Encoder: Linear -> ReLU -> Linear.  Accumulation is always f32.
    h = jnp.dot(x, w1_ref[...], preferred_element_type=jnp.float32) + b1_ref[...]
    h = jnp.maximum(h, 0.0).astype(cdt)
    z = (jnp.dot(h, w2_ref[...], preferred_element_type=jnp.float32)
         + b2_ref[...]).astype(cdt)

    # Decoder: Linear -> ReLU -> Linear.
    g = jnp.dot(z, w3_ref[...], preferred_element_type=jnp.float32) + b3_ref[...]
    g = jnp.maximum(g, 0.0).astype(cdt)
    y = jnp.dot(g, w4_ref[...], preferred_element_type=jnp.float32) + b4_ref[...]

    out_ref[...] = y.astype(out_ref.dtype)


# ---------------------------------------------------------------------------
# One-time weight preparation (hoisted out of the per-call forward)
# ---------------------------------------------------------------------------
def prepare_params(params, *, compute_dtype=jnp.float32):
    """Pad/cast weights into the kernel layout ONCE.

    Hidden (H) and latent (L) dims are zero-padded to multiples of 128 so all
    intermediate activations are lane-dense; this is bit-exact since padded
    weight rows/cols and biases are zero and ReLU(0)=0.  The model I/O dim D is
    left unpadded (activations stream at their true width).  Biases stay f32
    (they are added to the f32 accumulator).  compute_dtype=jnp.bfloat16 is
    recommended on all TPU generations (v5e/v6e/v7x): it halves weight bytes
    while keeping f32 accumulation; x itself is only cast at the matmul input.
    """
    D, H = params["w1"].shape
    L = params["w2"].shape[1]
    Hp = _round_up(H, 128)
    Lp = _round_up(L, 128)
    cdt = compute_dtype

    def pad_w(w, rows, cols):
        out = jnp.zeros((rows, cols), cdt)
        return out.at[: w.shape[0], : w.shape[1]].set(w.astype(cdt))

    def pad_b(b, cols):
        out = jnp.zeros((1, cols), jnp.float32)
        return out.at[:, : b.shape[1]].set(b.astype(jnp.float32))

    return dict(
        w1=pad_w(params["w1"], D, Hp),  b1=pad_b(params["b1"], Hp),
        w2=pad_w(params["w2"], Hp, Lp), b2=pad_b(params["b2"], Lp),
        w3=pad_w(params["w3"], Lp, Hp), b3=pad_b(params["b3"], Hp),
        w4=pad_w(params["w4"], Hp, D),  b4=pad_b(params["b4"], D),
    )


# ---------------------------------------------------------------------------
# Forward
# ---------------------------------------------------------------------------
@functools.partial(jax.jit, static_argnames=("batch_tile", "out_dtype"))
def autoencoder_forward(x, prepared, *, batch_tile=2048, out_dtype=None):
    """x: (B, D).  prepared: output of prepare_params.

    batch_tile: max rows per grid step (amortizes the ~0.35us/step overhead).
    out_dtype:  output dtype; default x.dtype.  Pass jnp.bfloat16 to cut output
                writeback bytes on this memory-bound kernel.
    """
    B, D = x.shape
    assert prepared["w1"].shape[0] == D, "input width mismatch vs prepared weights"
    Hp = prepared["w1"].shape[1]
    Lp = prepared["w2"].shape[1]
    cdt = prepared["w1"].dtype
    odt = jnp.dtype(out_dtype) if out_dtype is not None else jnp.dtype(x.dtype)

    # Sublane granularity of the batch tiles (bf16 blocks need 16-row multiples).
    sub = 16 if (jnp.dtype(x.dtype) == jnp.bfloat16
                 or odt == jnp.bfloat16) else 8

    # Batch tile: as large as allowed, but aim for >=2 grid steps so the
    # "parallel" batch axis shards across v7x's two TensorCores.
    tb = max(sub, min(_round_up(batch_tile, sub),
                      _round_up(pl.cdiv(B, 2), sub)))
    grid = (pl.cdiv(B, tb),)            # ragged last block is masked by Pallas

    # Generation-aware VMEM budget (limit is a cap, so a generous estimate is
    # safe as long as it stays below physical capacity minus headroom).
    cb = jnp.dtype(cdt).itemsize
    xb = jnp.dtype(x.dtype).itemsize
    ob = odt.itemsize
    weight_bytes = (D * Hp + Hp * Lp + Lp * Hp + Hp * D) * cb \
        + (2 * Hp + Lp + D) * 4
    io_bytes = 2 * tb * D * (xb + ob)            # double-buffered x + out tiles
    interm_bytes = tb * (2 * Hp + Lp + D) * 4    # f32 intermediates (upper bound)
    try:
        vmem_cap = int(pltpu.get_tpu_info().vmem_capacity_bytes)
    except Exception:
        vmem_cap = 64 * 1024 * 1024              # conservative (v7x per-core VMEM)
    est = 2 * weight_bytes + io_bytes + 2 * interm_bytes + (16 << 20)
    vmem_limit = int(max(32 << 20, min(est, vmem_cap - (8 << 20))))

    const_map = lambda i: (0, 0)
    row_map = lambda i: (i, 0)

    def resident_spec(shape):
        # Weights/biases never change across grid steps -> single VMEM buffer.
        try:
            return pl.BlockSpec(shape, const_map, pipeline_mode=pl.Buffered(1))
        except Exception:
            # Fallback for jax versions without pipeline_mode (default 2 buffers).
            return pl.BlockSpec(shape, const_map)

    out = pl.pallas_call(
        autoencoder_kernel,
        out_shape=jax.ShapeDtypeStruct((B, D), odt),
        grid=grid,
        in_specs=[
            pl.BlockSpec((tb, D), row_map),                    # x tile (true width D)
            resident_spec((D, Hp)), resident_spec((1, Hp)),    # w1, b1
            resident_spec((Hp, Lp)), resident_spec((1, Lp)),   # w2, b2
            resident_spec((Lp, Hp)), resident_spec((1, Hp)),   # w3, b3
            resident_spec((Hp, D)), resident_spec((1, D)),     # w4, b4
        ],
        out_specs=pl.BlockSpec((tb, D), row_map),
        compiler_params=pltpu.CompilerParams(
            dimension_semantics=("parallel",),
            vmem_limit_bytes=vmem_limit,
        ),
    )(x, prepared["w1"], prepared["b1"], prepared["w2"], prepared["b2"],
      prepared["w3"], prepared["b3"], prepared["w4"], prepared["b4"])
    return out


# ---------------------------------------------------------------------------
# Init + pure-JAX reference
# ---------------------------------------------------------------------------
def init_params(key, input_size, hidden_size, latent_size):
    """Mimics PyTorch's default Linear init: U(-1/sqrt(fan_in), 1/sqrt(fan_in))."""
    def linear_init(k, fan_in, fan_out):
        kw, kb = jax.random.split(k)
        bound = 1.0 / jnp.sqrt(fan_in)
        w = jax.random.uniform(kw, (fan_in, fan_out), jnp.float32, -bound, bound)
        b = jax.random.uniform(kb, (1, fan_out), jnp.float32, -bound, bound)
        return w, b

    k1, k2, k3, k4 = jax.random.split(key, 4)
    w1, b1 = linear_init(k1, input_size, hidden_size)
    w2, b2 = linear_init(k2, hidden_size, latent_size)
    w3, b3 = linear_init(k3, latent_size, hidden_size)
    w4, b4 = linear_init(k4, hidden_size, input_size)
    return dict(w1=w1, b1=b1, w2=w2, b2=b2, w3=w3, b3=b3, w4=w4, b4=b4)


def autoencoder_reference(x, p):
    h = jnp.maximum(x @ p["w1"] + p["b1"], 0.0)
    z = h @ p["w2"] + p["b2"]
    g = jnp.maximum(z @ p["w3"] + p["b3"], 0.0)
    return g @ p["w4"] + p["b4"]


if __name__ == "__main__":
    input_size, hidden_size, latent_size = 32, 16, 8

    key = jax.random.PRNGKey(0)
    kx, kp = jax.random.split(key)
    params = init_params(kp, input_size, hidden_size, latent_size)

    # One-time weight preparation (hoisted out of the per-call forward).
    prep_f32 = prepare_params(params, compute_dtype=jnp.float32)
    prep_bf16 = prepare_params(params, compute_dtype=jnp.bfloat16)

    # 1) Small batch, f32 compute — exact check (grid = 1).
    x_small = jax.random.normal(kx, (8, input_size), jnp.float32)
    out = jax.block_until_ready(autoencoder_forward(x_small, prep_f32))
    ref = autoencoder_reference(x_small, params)
    assert out.shape == (8, input_size)
    assert jnp.allclose(out, ref, atol=1e-5, rtol=1e-5), "f32 mismatch vs reference"

    # 2) Batch that is not a multiple of the tile — grid = 3 with a ragged
    #    (masked) last block, unpadded activations throughout.
    x_big = jax.random.normal(kx, (300, input_size), jnp.float32)
    out_big = jax.block_until_ready(
        autoencoder_forward(x_big, prep_f32, batch_tile=128))
    ref_big = autoencoder_reference(x_big, params)
    assert out_big.shape == (300, input_size)
    assert jnp.allclose(out_big, ref_big, atol=1e-5, rtol=1e-5), "tiled mismatch"

    # 3) bf16 operands with f32 accumulation (recommended on v5e/v6e/v7x).
    out_bf16 = jax.block_until_ready(autoencoder_forward(x_small, prep_bf16))
    assert out_bf16.dtype == jnp.float32
    assert jnp.allclose(out_bf16, ref, atol=5e-2, rtol=5e-2), "bf16 mismatch"

    print("KERNEL_OK")
</pallas_src>

<mosaic_0001>
module attributes {stable_mosaic.version = 11 : i64} {
  func.func @autoencoder_kernel(%arg0: i32, %arg1: memref<8x32xf32, #tpu.memory_space<vmem>>, %arg2: memref<32x128xf32, #tpu.memory_space<vmem>>, %arg3: memref<1x128xf32, #tpu.memory_space<vmem>>, %arg4: memref<128x128xf32, #tpu.memory_space<vmem>>, %arg5: memref<1x128xf32, #tpu.memory_space<vmem>>, %arg6: memref<128x128xf32, #tpu.memory_space<vmem>>, %arg7: memref<1x128xf32, #tpu.memory_space<vmem>>, %arg8: memref<128x32xf32, #tpu.memory_space<vmem>>, %arg9: memref<1x32xf32, #tpu.memory_space<vmem>>, %arg10: memref<8x32xf32, #tpu.memory_space<vmem>>) attributes {dimension_semantics = [#tpu.dimension_semantics<parallel>], iteration_bounds = array<i64: 1>, scalar_prefetch = 0 : i64, scratch_operands = 0 : i64, tpu.core_type = #tpu.core_type<tc>, window_params = [{transform_indices = @transform_0, window_bounds = array<i64: 8, 32>}, {pipeline_mode = #tpu.pipeline_mode<synchronous>, transform_indices = @transform_1, window_bounds = array<i64: 32, 128>}, {pipeline_mode = #tpu.pipeline_mode<synchronous>, transform_indices = @transform_2, window_bounds = array<i64: 1, 128>}, {pipeline_mode = #tpu.pipeline_mode<synchronous>, transform_indices = @transform_3, window_bounds = array<i64: 128, 128>}, {pipeline_mode = #tpu.pipeline_mode<synchronous>, transform_indices = @transform_4, window_bounds = array<i64: 1, 128>}, {pipeline_mode = #tpu.pipeline_mode<synchronous>, transform_indices = @transform_5, window_bounds = array<i64: 128, 128>}, {pipeline_mode = #tpu.pipeline_mode<synchronous>, transform_indices = @transform_6, window_bounds = array<i64: 1, 128>}, {pipeline_mode = #tpu.pipeline_mode<synchronous>, transform_indices = @transform_7, window_bounds = array<i64: 128, 32>}, {pipeline_mode = #tpu.pipeline_mode<synchronous>, transform_indices = @transform_8, window_bounds = array<i64: 1, 32>}, {transform_indices = @transform_9, window_bounds = array<i64: 8, 32>}]} {
    %c0 = arith.constant 0 : index
    %c0_0 = arith.constant 0 : index
    %0 = vector.load %arg1[%c0, %c0_0] : memref<8x32xf32, #tpu.memory_space<vmem>>, vector<8x32xf32>
    %c0_1 = arith.constant 0 : index
    %c0_2 = arith.constant 0 : index
    %1 = vector.load %arg2[%c0_1, %c0_2] : memref<32x128xf32, #tpu.memory_space<vmem>>, vector<32x128xf32>
    %cst = arith.constant dense<0.000000e+00> : vector<8x128xf32>
    %2 = tpu.matmul %0, %1, %cst {dimension_numbers = #tpu.dot_dimension_numbers<[1], [0], [0], [1], [0, 0, 1, 1], [], []>} : vector<8x32xf32>, vector<32x128xf32>, vector<8x128xf32> -> vector<8x128xf32>
    %c0_3 = arith.constant 0 : index
    %c0_4 = arith.constant 0 : index
    %3 = vector.load %arg3[%c0_3, %c0_4] : memref<1x128xf32, #tpu.memory_space<vmem>>, vector<1x128xf32>
    %4 = vector.broadcast %3 : vector<1x128xf32> to vector<8x128xf32>
    %5 = arith.addf %2, %4 : vector<8x128xf32>
    %cst_5 = arith.constant 0.000000e+00 : f32
    %6 = vector.broadcast %cst_5 : f32 to vector<8x128xf32>
    %7 = arith.maximumf %5, %6 : vector<8x128xf32>
    %c0_6 = arith.constant 0 : index
    %c0_7 = arith.constant 0 : index
    %8 = vector.load %arg4[%c0_6, %c0_7] : memref<128x128xf32, #tpu.memory_space<vmem>>, vector<128x128xf32>
    %cst_8 = arith.constant dense<0.000000e+00> : vector<8x128xf32>
    %9 = tpu.matmul %7, %8, %cst_8 {dimension_numbers = #tpu.dot_dimension_numbers<[1], [0], [0], [1], [0, 0, 1, 1], [], []>} : vector<8x128xf32>, vector<128x128xf32>, vector<8x128xf32> -> vector<8x128xf32>
    %c0_9 = arith.constant 0 : index
    %c0_10 = arith.constant 0 : index
    %10 = vector.load %arg5[%c0_9, %c0_10] : memref<1x128xf32, #tpu.memory_space<vmem>>, vector<1x128xf32>
    %11 = vector.broadcast %10 : vector<1x128xf32> to vector<8x128xf32>
    %12 = arith.addf %9, %11 : vector<8x128xf32>
    %c0_11 = arith.constant 0 : index
    %c0_12 = arith.constant 0 : index
    %13 = vector.load %arg6[%c0_11, %c0_12] : memref<128x128xf32, #tpu.memory_space<vmem>>, vector<128x128xf32>
    %cst_13 = arith.constant dense<0.000000e+00> : vector<8x128xf32>
    %14 = tpu.matmul %12, %13, %cst_13 {dimension_numbers = #tpu.dot_dimension_numbers<[1], [0], [0], [1], [0, 0, 1, 1], [], []>} : vector<8x128xf32>, vector<128x128xf32>, vector<8x128xf32> -> vector<8x128xf32>
    %c0_14 = arith.constant 0 : index
    %c0_15 = arith.constant 0 : index
    %15 = vector.load %arg7[%c0_14, %c0_15] : memref<1x128xf32, #tpu.memory_space<vmem>>, vector<1x128xf32>
    %16 = vector.broadcast %15 : vector<1x128xf32> to vector<8x128xf32>
    %17 = arith.addf %14, %16 : vector<8x128xf32>
    %cst_16 = arith.constant 0.000000e+00 : f32
    %18 = vector.broadcast %cst_16 : f32 to vector<8x128xf32>
    %19 = arith.maximumf %17, %18 : vector<8x128xf32>
    %c0_17 = arith.constant 0 : index
    %c0_18 = arith.constant 0 : index
    %20 = vector.load %arg8[%c0_17, %c0_18] : memref<128x32xf32, #tpu.memory_space<vmem>>, vector<128x32xf32>
    %cst_19 = arith.constant dense<0.000000e+00> : vector<8x32xf32>
    %21 = tpu.matmul %19, %20, %cst_19 {dimension_numbers = #tpu.dot_dimension_numbers<[1], [0], [0], [1], [0, 0, 1, 1], [], []>} : vector<8x128xf32>, vector<128x32xf32>, vector<8x32xf32> -> vector<8x32xf32>
    %c0_20 = arith.constant 0 : index
    %c0_21 = arith.constant 0 : index
    %22 = vector.load %arg9[%c0_20, %c0_21] : memref<1x32xf32, #tpu.memory_space<vmem>>, vector<1x32xf32>
    %23 = vector.broadcast %22 : vector<1x32xf32> to vector<8x32xf32>
    %24 = arith.addf %21, %23 : vector<8x32xf32>
    %c0_22 = arith.constant 0 : index
    %c0_23 = arith.constant 0 : index
    %25 = vector.load %arg10[%c0_22, %c0_23] : memref<8x32xf32, #tpu.memory_space<vmem>>, vector<8x32xf32>
    tpu.vector_store %arg10[%c0_22, %c0_23], %24 {strides = array<i32>} : memref<8x32xf32, #tpu.memory_space<vmem>>, vector<8x32xf32>,
    return
  }
  func.func @transform_0(%arg0: i32) -> (i32, i32) {
    %c0_i32 = arith.constant 0 : i32
    %c0_i32_0 = arith.constant 0 : i32
    return %arg0, %c0_i32 : i32, i32
  }
  func.func @transform_1(%arg0: i32) -> (i32, i32) {
    %c0_i32 = arith.constant 0 : i32
    %c0_i32_0 = arith.constant 0 : i32
    %c0_i32_1 = arith.constant 0 : i32
    return %c0_i32, %c0_i32_0 : i32, i32
  }
  func.func @transform_2(%arg0: i32) -> (i32, i32) {
    %c0_i32 = arith.constant 0 : i32
    %c0_i32_0 = arith.constant 0 : i32
    %c0_i32_1 = arith.constant 0 : i32
    return %c0_i32, %c0_i32_0 : i32, i32
  }
  func.func @transform_3(%arg0: i32) -> (i32, i32) {
    %c0_i32 = arith.constant 0 : i32
    %c0_i32_0 = arith.constant 0 : i32
    %c0_i32_1 = arith.constant 0 : i32
    return %c0_i32, %c0_i32_0 : i32, i32
  }
  func.func @transform_4(%arg0: i32) -> (i32, i32) {
    %c0_i32 = arith.constant 0 : i32
    %c0_i32_0 = arith.constant 0 : i32
    %c0_i32_1 = arith.constant 0 : i32
    return %c0_i32, %c0_i32_0 : i32, i32
  }
  func.func @transform_5(%arg0: i32) -> (i32, i32) {
    %c0_i32 = arith.constant 0 : i32
    %c0_i32_0 = arith.constant 0 : i32
    %c0_i32_1 = arith.constant 0 : i32
    return %c0_i32, %c0_i32_0 : i32, i32
  }
  func.func @transform_6(%arg0: i32) -> (i32, i32) {
    %c0_i32 = arith.constant 0 : i32
    %c0_i32_0 = arith.constant 0 : i32
    %c0_i32_1 = arith.constant 0 : i32
    return %c0_i32, %c0_i32_0 : i32, i32
  }
  func.func @transform_7(%arg0: i32) -> (i32, i32) {
    %c0_i32 = arith.constant 0 : i32
    %c0_i32_0 = arith.constant 0 : i32
    %c0_i32_1 = arith.constant 0 : i32
    return %c0_i32, %c0_i32_0 : i32, i32
  }
  func.func @transform_8(%arg0: i32) -> (i32, i32) {
    %c0_i32 = arith.constant 0 : i32
    %c0_i32_0 = arith.constant 0 : i32
    %c0_i32_1 = arith.constant 0 : i32
    return %c0_i32, %c0_i32_0 : i32, i32
  }
  func.func @transform_9(%arg0: i32) -> (i32, i32) {
    %c0_i32 = arith.constant 0 : i32
    %c0_i32_0 = arith.constant 0 : i32
    return %arg0, %c0_i32 : i32, i32
  }
}

</mosaic_0001>

<llo_original>
// kernel: autoencoder_forward.1
$region0: #{autoencoder_forward.1}
  #allocation0 [shape = 'u32[]', space=smem, size = 0x4, offset = 0x4, fixed_abs, tag = 'smem constant byte address 0x4 - core index']
  #allocation1 [shape = 'u32[144,128]{1,0:T(1,128)}', space=vmem, size = 0x12000, scoped, tag = 'internal scratch']
  %s0 = inlined_call_operand.vmem [shape: f32[8,32], index: 0, kind: input, shape index: {}]
  %s1 = inlined_call_operand.vmem [shape: f32[32,128], index: 1, kind: input, shape index: {}]
  %s2 = inlined_call_operand.vmem [shape: f32[1,128], index: 2, kind: input, shape index: {}]
  %s3 = inlined_call_operand.vmem [shape: f32[128,128], index: 3, kind: input, shape index: {}]
  %s4 = inlined_call_operand.vmem [shape: f32[1,128], index: 4, kind: input, shape index: {}]
  %s5 = inlined_call_operand.hbm [shape: f32[128,128], index: 5, kind: input, shape index: {}]
  %s6 = inlined_call_operand.vmem [shape: f32[1,128], index: 6, kind: input, shape index: {}]
  %s7 = inlined_call_operand.vmem [shape: f32[128,32], index: 7, kind: input, shape index: {}]
  %s8 = inlined_call_operand.vmem [shape: f32[1,32], index: 8, kind: input, shape index: {}]
  %s9 = inlined_call_operand.hbm [shape: f32[8,32], index: 9, kind: output, shape index: {}]
  %s10 = sld [smem:[#allocation0]]
  $region50: #{autoencoder_forward.1} parent=0
    _
  %s12 = ssub.s32 1, %s10
  %s13 = scalar_select 0, %s12, %s10
  $region1: #{autoencoder_forward.1} parent=0
    #allocation2 [shape = 'u8[65536]{0}', space=vmem, size = 0x10000, scoped, tag = 'input window, operand 5, single buffered']
    #allocation3 [shape = 's32[1]{0}', space=sflag, size = 0x4, scoped, tag = 'scoped memory for autoencoder_forward.1']
    #allocation4 [shape = 's32[1]{0}', space=sflag, size = 0x4, scoped, tag = 'scoped memory for autoencoder_forward.1']
    #allocation5 [shape = 'u8[4096]{0}', space=vmem, size = 0x1000, scoped, tag = 'output window, operand 0, single buffered']
    %14 = vsyncpa [#allocation3], 0
    %15 = vsyncpa [#allocation4], 0
    // Predicated region
    $region2: #{autoencoder_forward.1} parent=1 // pred_check
      _
    $region3: #{autoencoder_forward.1} parent=1 // pred_check_branch
      %17 = sbr.rel (0) target = $region5
    $region4: #{autoencoder_forward.1} parent=1 // pred_region
      _
    $region5: #{autoencoder_forward.1} parent=1 // pred_fallthru
      _
    // Predicated region
    $region6: #{autoencoder_forward.1} parent=1 // pred_check
      _
    $region7: #{autoencoder_forward.1} parent=1 // pred_check_branch
      %19 = sbr.rel (0) target = $region9
    $region8: #{autoencoder_forward.1} parent=1 // pred_region
      _
    $region9: #{autoencoder_forward.1} parent=1 // pred_fallthru
      _
    // Predicated region
    $region10: #{autoencoder_forward.1} parent=1 // pred_check
      _
    $region11: #{autoencoder_forward.1} parent=1 // pred_check_branch
      %21 = sbr.rel (0) target = $region13
    $region12: #{autoencoder_forward.1} parent=1 // pred_region
      _
    $region13: #{autoencoder_forward.1} parent=1 // pred_fallthru
      _
    // Predicated region
    $region14: #{autoencoder_forward.1} parent=1 // pred_check
      _
    $region15: #{autoencoder_forward.1} parent=1 // pred_check_branch
      %23 = sbr.rel (0) target = $region17
    $region16: #{autoencoder_forward.1} parent=1 // pred_region
      _
    $region17: #{autoencoder_forward.1} parent=1 // pred_fallthru
      _
    // Predicated region
    $region18: #{autoencoder_forward.1} parent=1 // pred_check
      _
    $region19: #{autoencoder_forward.1} parent=1 // pred_check_branch
      %25 = sbr.rel (0) target = $region21
    $region20: #{autoencoder_forward.1} parent=1 // pred_region
      _
    $region21: #{autoencoder_forward.1} parent=1 // pred_fallthru
      _
    // Predicated region
    $region22: #{autoencoder_forward.1} parent=1 // pred_check
      _
    $region23: #{autoencoder_forward.1} parent=1 // pred_check_branch
      %27 = sbr.rel (0) target = $region25
    $region24: #{autoencoder_forward.1} parent=1 // pred_region
      %s29 = ssub.s32 2048, 2048
      %30 = vsyncadd [#allocation3], %s29
      %s31 = sshll.u32 [#allocation2], 4
      %s32 = int_to_ptr.vmem [resolvable:$true] %s31
      %37 = dma.hbm_to_vmem [thread:$0]  %s5, 2048, %s32, [#allocation3], 128, 128, 8
    $region25: #{autoencoder_forward.1} parent=1 // pred_fallthru
      _
    // Predicated region
    $region26: #{autoencoder_forward.1} parent=1 // pred_check
      _
    $region27: #{autoencoder_forward.1} parent=1 // pred_check_branch
      %39 = sbr.rel (0) target = $region29
    $region28: #{autoencoder_forward.1} parent=1 // pred_region
      _
    $region29: #{autoencoder_forward.1} parent=1 // pred_fallthru
      _
    // Predicated region
    $region30: #{autoencoder_forward.1} parent=1 // pred_check
      _
    $region31: #{autoencoder_forward.1} parent=1 // pred_check_branch
      %41 = sbr.rel (0) target = $region33
    $region32: #{autoencoder_forward.1} parent=1 // pred_region
      _
    $region33: #{autoencoder_forward.1} parent=1 // pred_fallthru
      _
    // Predicated region
    $region34: #{autoencoder_forward.1} parent=1 // pred_check
      _
    $region35: #{autoencoder_forward.1} parent=1 // pred_check_branch
      %43 = sbr.rel (0) target = $region37
    $region36: #{autoencoder_forward.1} parent=1 // pred_region
      _
    $region37: #{autoencoder_forward.1} parent=1 // pred_fallthru
      _
    // Predicated region
    $region38: #{autoencoder_forward.1} parent=1 // pred_check
      _
    $region39: #{autoencoder_forward.1} parent=1 // pred_check_branch
      %45 = sbr.rel (0) target = $region41
    $region40: #{autoencoder_forward.1} parent=1 // pred_region
      %46 = dma.done [#allocation3], 2048
    $region41: #{autoencoder_forward.1} parent=1 // pred_fallthru
      _
    %v47 = vld [vmem:[%s0] sm:$0xff]
    %v48 = vld [vmem:[%s1] sm:$0xff]
    %v49 = vld [vmem:[%s1 + $0x8] sm:$0xff]
    %v50 = vld [vmem:[%s1 + $0x10] sm:$0xff]
    %v51 = vld [vmem:[%s1 + $0x18] sm:$0xff]
    %v52 = vld [vmem:[%s2] sm:$0x1]
    %v54 = vlaneseq
    %v55 = vshrl.u32 %v54, 7
    %v56 = vsub.s32 0, %v55
    %v57 = vrot.slane %v52, %v56
    %vm59 = vcmask 261120
    %v61 = vsel %vm59, %v47, 0
    %63 = vmatprep.subr.mxu0 0.0
    %64 = vmatpush1.msra.mxu0 %v48
    %65 = vmatprep.subr.mxu0 0.0
    %66 = vmatpush1.msra.mxu0 %v49
    %67 = vmatprep.subr.mxu0 0.0
    %68 = vmatpush1.msra.mxu0 %v50
    %69 = vmatprep.subr.mxu0 0.0
    %70 = vmatpush1.msra.mxu0 %v51
    %71 = vmatprep.subr.mxu0 0.0
    %72 = vmatpush1.msra.mxu0 0.0
    %73 = vmatprep.subr.mxu0 0.0
    %74 = vmatpush1.msra.mxu0 0.0
    %75 = vmatprep.subr.mxu0 0.0
    %76 = vmatpush1.msra.mxu0 0.0
    %77 = vmatprep.subr.mxu0 0.0
    %78 = vmatpush1.msra.mxu0 0.0
    %79 = vmatprep.subr.mxu0 0.0
    %80 = vmatpush1.msra.mxu0 0.0
    %81 = vmatprep.subr.mxu0 0.0
    %82 = vmatpush1.msra.mxu0 0.0
    %83 = vmatprep.subr.mxu0 0.0
    %84 = vmatpush1.msra.mxu0 0.0
    %85 = vmatprep.subr.mxu0 0.0
    %86 = vmatpush1.msra.mxu0 0.0
    %87 = vmatprep.subr.mxu0 0.0
    %88 = vmatpush1.msra.mxu0 0.0
    %89 = vmatprep.subr.mxu0 0.0
    %90 = vmatpush1.msra.mxu0 0.0
    %91 = vmatprep.subr.mxu0 0.0
    %92 = vmatpush1.msra.mxu0 0.0
    %93 = vmatprep.subr.mxu0 0.0
    %94 = vmatpush1.msra.mxu0 0.0
    %95 = vmatprep.subr.mxu0 0.0
    %96 = vmatpush1.msra.mxu0 0.0
    %97 = vmatprep.subr.mxu0 0.0
    %98 = vmatpush1.msra.mxu0 0.0
    %99 = vmatprep.subr.mxu0 0.0
    %100 = vmatpush1.msra.mxu0 0.0
    %101 = vmatprep.subr.mxu0 0.0
    %102 = vmatpush1.msra.mxu0 0.0
    %103 = vmatprep.subr.mxu0 0.0
    %104 = vmatpush1.msra.mxu0 0.0
    %105 = vmatprep.subr.mxu0 0.0
    %106 = vmatpush1.msra.mxu0 0.0
    %107 = vmatprep.subr.mxu0 0.0
    %108 = vmatpush1.msra.mxu0 0.0
    %109 = vmatprep.subr.mxu0 0.0
    %110 = vmatpush1.msra.mxu0 0.0
    %111 = vmatprep.subr.mxu0 0.0
    %112 = vmatpush1.msra.mxu0 0.0
    %113 = vmatprep.subr.mxu0 0.0
    %114 = vmatpush1.msra.mxu0 0.0
    %115 = vmatprep.subr.mxu0 0.0
    %116 = vmatpush1.msra.mxu0 0.0
    %117 = vmatprep.subr.mxu0 0.0
    %118 = vmatpush1.msra.mxu0 0.0
    %119 = vmatprep.subr.mxu0 0.0
    %120 = vmatpush1.msra.mxu0 0.0
    %121 = vmatprep.subr.mxu0 0.0
    %122 = vmatpush1.msra.mxu0 0.0
    %123 = vmatprep.subr.mxu0 0.0
    %124 = vmatpush1.msra.mxu0 0.0
    %125 = vmatprep.subr.mxu0 0.0
    %126 = vmatpush1.msra.mxu0 0.0
    %127 = vmatprep.mubr.f32.mxu0 0.0
    %128 = vmatmul.mubr.f32.gmra.mrb[0].mxu0 %v61
    %v129 = vpop.f32.mrb[0].mxu0
    %v130 = vadd.f32 %v57, %v129
    %v131 = vpop.f32.mrb[0].mxu0
    %132 = vdwg.mxu0
    %v133 = vmax.f32 %v130, 0.0
    %v134 = vld [vmem:[%s3] sm:$0xff]
    %v135 = vld [vmem:[%s3 + $0x8] sm:$0xff]
    %v136 = vld [vmem:[%s3 + $0x10] sm:$0xff]
    %v137 = vld [vmem:[%s3 + $0x18] sm:$0xff]
    %v138 = vld [vmem:[%s3 + $0x20] sm:$0xff]
    %v139 = vld [vmem:[%s3 + $0x28] sm:$0xff]
    %v140 = vld [vmem:[%s3 + $0x30] sm:$0xff]
    %v141 = vld [vmem:[%s3 + $0x38] sm:$0xff]
    %v142 = vld [vmem:[%s3 + $0x40] sm:$0xff]
    %v143 = vld [vmem:[%s3 + $0x48] sm:$0xff]
    %v144 = vld [vmem:[%s3 + $0x50] sm:$0xff]
    %v145 = vld [vmem:[%s3 + $0x58] sm:$0xff]
    %v146 = vld [vmem:[%s3 + $0x60] sm:$0xff]
    %v147 = vld [vmem:[%s3 + $0x68] sm:$0xff]
    %v148 = vld [vmem:[%s3 + $0x70] sm:$0xff]
    %v149 = vld [vmem:[%s3 + $0x78] sm:$0xff]
    %v150 = vld [vmem:[%s4] sm:$0x1]
    %v152 = vlaneseq
    %v153 = vshrl.u32 %v152, 7
    %v154 = vsub.s32 0, %v153
    %v155 = vrot.slane %v150, %v154
    %157 = vmatprep.subr.mxu0 0.0
    %158 = vmatpush1.msra.mxu0 %v134
    %159 = vmatprep.subr.mxu0 0.0
    %160 = vmatpush1.msra.mxu0 %v135
    %161 = vmatprep.subr.mxu0 0.0
    %162 = vmatpush1.msra.mxu0 %v136
    %163 = vmatprep.subr.mxu0 0.0
    %164 = vmatpush1.msra.mxu0 %v137
    %165 = vmatprep.subr.mxu0 0.0
    %166 = vmatpush1.msra.mxu0 %v138
    %167 = vmatprep.subr.mxu0 0.0
    %168 = vmatpush1.msra.mxu0 %v139
    %169 = vmatprep.subr.mxu0 0.0
    %170 = vmatpush1.msra.mxu0 %v140
    %171 = vmatprep.subr.mxu0 0.0
    %172 = vmatpush1.msra.mxu0 %v141
    %173 = vmatprep.subr.mxu0 0.0
    %174 = vmatpush1.msra.mxu0 %v142
    %175 = vmatprep.subr.mxu0 0.0
    %176 = vmatpush1.msra.mxu0 %v143
    %177 = vmatprep.subr.mxu0 0.0
    %178 = vmatpush1.msra.mxu0 %v144
    %179 = vmatprep.subr.mxu0 0.0
    %180 = vmatpush1.msra.mxu0 %v145
    %181 = vmatprep.subr.mxu0 0.0
    %182 = vmatpush1.msra.mxu0 %v146
    %183 = vmatprep.subr.mxu0 0.0
    %184 = vmatpush1.msra.mxu0 %v147
    %185 = vmatprep.subr.mxu0 0.0
    %186 = vmatpush1.msra.mxu0 %v148
    %187 = vmatprep.subr.mxu0 0.0
    %188 = vmatpush1.msra.mxu0 %v149
    %189 = vmatprep.subr.mxu0 0.0
    %190 = vmatpush1.msra.mxu0 0.0
    %191 = vmatprep.subr.mxu0 0.0
    %192 = vmatpush1.msra.mxu0 0.0
    %193 = vmatprep.subr.mxu0 0.0
    %194 = vmatpush1.msra.mxu0 0.0
    %195 = vmatprep.subr.mxu0 0.0
    %196 = vmatpush1.msra.mxu0 0.0
    %197 = vmatprep.subr.mxu0 0.0
    %198 = vmatpush1.msra.mxu0 0.0
    %199 = vmatprep.subr.mxu0 0.0
    %200 = vmatpush1.msra.mxu0 0.0
    %201 = vmatprep.subr.mxu0 0.0
    %202 = vmatpush1.msra.mxu0 0.0
    %203 = vmatprep.subr.mxu0 0.0
    %204 = vmatpush1.msra.mxu0 0.0
    %205 = vmatprep.subr.mxu0 0.0
    %206 = vmatpush1.msra.mxu0 0.0
    %207 = vmatprep.subr.mxu0 0.0
    %208 = vmatpush1.msra.mxu0 0.0
    %209 = vmatprep.subr.mxu0 0.0
    %210 = vmatpush1.msra.mxu0 0.0
    %211 = vmatprep.subr.mxu0 0.0
    %212 = vmatpush1.msra.mxu0 0.0
    %213 = vmatprep.subr.mxu0 0.0
    %214 = vmatpush1.msra.mxu0 0.0
    %215 = vmatprep.subr.mxu0 0.0
    %216 = vmatpush1.msra.mxu0 0.0
    %217 = vmatprep.subr.mxu0 0.0
    %218 = vmatpush1.msra.mxu0 0.0
    %219 = vmatprep.subr.mxu0 0.0
    %220 = vmatpush1.msra.mxu0 0.0
    %221 = vmatprep.mubr.f32.mxu0 0.0
    %222 = vmatmul.mubr.f32.gmra.mrb[0].mxu0 %v133
    %v223 = vpop.f32.mrb[0].mxu0
    %v224 = vadd.f32 %v155, %v223
    %v225 = vpop.f32.mrb[0].mxu0
    %226 = vdwg.mxu0
    %v227 = vld [vmem:[#allocation2] sm:$0xff]
    %v228 = vld [vmem:[#allocation2 + $0x8] sm:$0xff]
    %v229 = vld [vmem:[#allocation2 + $0x10] sm:$0xff]
    %v230 = vld [vmem:[#allocation2 + $0x18] sm:$0xff]
    %v231 = vld [vmem:[#allocation2 + $0x20] sm:$0xff]
    %v232 = vld [vmem:[#allocation2 + $0x28] sm:$0xff]
    %v233 = vld [vmem:[#allocation2 + $0x30] sm:$0xff]
    %v234 = vld [vmem:[#allocation2 + $0x38] sm:$0xff]
    %v235 = vld [vmem:[#allocation2 + $0x40] sm:$0xff]
    %v236 = vld [vmem:[#allocation2 + $0x48] sm:$0xff]
    %v237 = vld [vmem:[#allocation2 + $0x50] sm:$0xff]
    %v238 = vld [vmem:[#allocation2 + $0x58] sm:$0xff]
    %v239 = vld [vmem:[#allocation2 + $0x60] sm:$0xff]
    %v240 = vld [vmem:[#allocation2 + $0x68] sm:$0xff]
    %v241 = vld [vmem:[#allocation2 + $0x70] sm:$0xff]
    %v242 = vld [vmem:[#allocation2 + $0x78] sm:$0xff]
    %v243 = vld [vmem:[%s6] sm:$0x1]
    %v245 = vlaneseq
    %v246 = vshrl.u32 %v245, 7
    %v247 = vsub.s32 0, %v246
    %v248 = vrot.slane %v243, %v247
    %250 = vmatprep.subr.mxu0 0.0
    %251 = vmatpush1.msra.mxu0 %v227
    %252 = vmatprep.subr.mxu0 0.0
    %253 = vmatpush1.msra.mxu0 %v228
    %254 = vmatprep.subr.mxu0 0.0
    %255 = vmatpush1.msra.mxu0 %v229
    %256 = vmatprep.subr.mxu0 0.0
    %257 = vmatpush1.msra.mxu0 %v230
    %258 = vmatprep.subr.mxu0 0.0
    %259 = vmatpush1.msra.mxu0 %v231
    %260 = vmatprep.subr.mxu0 0.0
    %261 = vmatpush1.msra.mxu0 %v232
    %262 = vmatprep.subr.mxu0 0.0
    %263 = vmatpush1.msra.mxu0 %v233
    %264 = vmatprep.subr.mxu0 0.0
    %265 = vmatpush1.msra.mxu0 %v234
    %266 = vmatprep.subr.mxu0 0.0
    %267 = vmatpush1.msra.mxu0 %v235
    %268 = vmatprep.subr.mxu0 0.0
    %269 = vmatpush1.msra.mxu0 %v236
    %270 = vmatprep.subr.mxu0 0.0
    %271 = vmatpush1.msra.mxu0 %v237
    %272 = vmatprep.subr.mxu0 0.0
    %273 = vmatpush1.msra.mxu0 %v238
    %274 = vmatprep.subr.mxu0 0.0
    %275 = vmatpush1.msra.mxu0 %v239
    %276 = vmatprep.subr.mxu0 0.0
    %277 = vmatpush1.msra.mxu0 %v240
    %278 = vmatprep.subr.mxu0 0.0
    %279 = vmatpush1.msra.mxu0 %v241
    %280 = vmatprep.subr.mxu0 0.0
    %281 = vmatpush1.msra.mxu0 %v242
    %282 = vmatprep.subr.mxu0 0.0
    %283 = vmatpush1.msra.mxu0 0.0
    %284 = vmatprep.subr.mxu0 0.0
    %285 = vmatpush1.msra.mxu0 0.0
    %286 = vmatprep.subr.mxu0 0.0
    %287 = vmatpush1.msra.mxu0 0.0
    %288 = vmatprep.subr.mxu0 0.0
    %289 = vmatpush1.msra.mxu0 0.0
    %290 = vmatprep.subr.mxu0 0.0
    %291 = vmatpush1.msra.mxu0 0.0
    %292 = vmatprep.subr.mxu0 0.0
    %293 = vmatpush1.msra.mxu0 0.0
    %294 = vmatprep.subr.mxu0 0.0
    %295 = vmatpush1.msra.mxu0 0.0
    %296 = vmatprep.subr.mxu0 0.0
    %297 = vmatpush1.msra.mxu0 0.0
    %298 = vmatprep.subr.mxu0 0.0
    %299 = vmatpush1.msra.mxu0 0.0
    %300 = vmatprep.subr.mxu0 0.0
    %301 = vmatpush1.msra.mxu0 0.0
    %302 = vmatprep.subr.mxu0 0.0
    %303 = vmatpush1.msra.mxu0 0.0
    %304 = vmatprep.subr.mxu0 0.0
    %305 = vmatpush1.msra.mxu0 0.0
    %306 = vmatprep.subr.mxu0 0.0
    %307 = vmatpush1.msra.mxu0 0.0
    %308 = vmatprep.subr.mxu0 0.0
    %309 = vmatpush1.msra.mxu0 0.0
    %310 = vmatprep.subr.mxu0 0.0
    %311 = vmatpush1.msra.mxu0 0.0
    %312 = vmatprep.subr.mxu0 0.0
    %313 = vmatpush1.msra.mxu0 0.0
    %314 = vmatprep.mubr.f32.mxu0 0.0
    %315 = vmatmul.mubr.f32.gmra.mrb[0].mxu0 %v224
    %v316 = vpop.f32.mrb[0].mxu0
    %v317 = vadd.f32 %v248, %v316
    %v318 = vpop.f32.mrb[0].mxu0
    %319 = vdwg.mxu0
    %v320 = vmax.f32 %v317, 0.0
    %v321 = vld [vmem:[%s7] sm:$0xff]
    %v322 = vld [vmem:[%s7 + $0x8] sm:$0xff]
    %v323 = vld [vmem:[%s7 + $0x10] sm:$0xff]
    %v324 = vld [vmem:[%s7 + $0x18] sm:$0xff]
    %v325 = vld [vmem:[%s7 + $0x20] sm:$0xff]
    %v326 = vld [vmem:[%s7 + $0x28] sm:$0xff]
    %v327 = vld [vmem:[%s7 + $0x30] sm:$0xff]
    %v328 = vld [vmem:[%s7 + $0x38] sm:$0xff]
    %v329 = vld [vmem:[%s7 + $0x40] sm:$0xff]
    %v330 = vld [vmem:[%s7 + $0x48] sm:$0xff]
    %v331 = vld [vmem:[%s7 + $0x50] sm:$0xff]
    %v332 = vld [vmem:[%s7 + $0x58] sm:$0xff]
    %v333 = vld [vmem:[%s7 + $0x60] sm:$0xff]
    %v334 = vld [vmem:[%s7 + $0x68] sm:$0xff]
    %v335 = vld [vmem:[%s7 + $0x70] sm:$0xff]
    %v336 = vld [vmem:[%s7 + $0x78] sm:$0xff]
    %v337 = vld [vmem:[%s8] sm:$0x1]
    %v339 = vlaneseq
    %v340 = vshrl.u32 %v339, 7
    %v341 = vsub.s32 0, %v340
    %v342 = vrot.slane %v337, %v341
    %344 = vmatprep.subr.mxu0 0.0
    %345 = vmatpush1.msra.mxu0 %v321
    %346 = vmatprep.subr.mxu0 0.0
    %347 = vmatpush1.msra.mxu0 %v322
    %348 = vmatprep.subr.mxu0 0.0
    %349 = vmatpush1.msra.mxu0 %v323
    %350 = vmatprep.subr.mxu0 0.0
    %351 = vmatpush1.msra.mxu0 %v324
    %352 = vmatprep.subr.mxu0 0.0
    %353 = vmatpush1.msra.mxu0 %v325
    %354 = vmatprep.subr.mxu0 0.0
    %355 = vmatpush1.msra.mxu0 %v326
    %356 = vmatprep.subr.mxu0 0.0
    %357 = vmatpush1.msra.mxu0 %v327
    %358 = vmatprep.subr.mxu0 0.0
    %359 = vmatpush1.msra.mxu0 %v328
    %360 = vmatprep.subr.mxu0 0.0
    %361 = vmatpush1.msra.mxu0 %v329
    %362 = vmatprep.subr.mxu0 0.0
    %363 = vmatpush1.msra.mxu0 %v330
    %364 = vmatprep.subr.mxu0 0.0
    %365 = vmatpush1.msra.mxu0 %v331
    %366 = vmatprep.subr.mxu0 0.0
    %367 = vmatpush1.msra.mxu0 %v332
    %368 = vmatprep.subr.mxu0 0.0
    %369 = vmatpush1.msra.mxu0 %v333
    %370 = vmatprep.subr.mxu0 0.0
    %371 = vmatpush1.msra.mxu0 %v334
    %372 = vmatprep.subr.mxu0 0.0
    %373 = vmatpush1.msra.mxu0 %v335
    %374 = vmatprep.subr.mxu0 0.0
    %375 = vmatpush1.msra.mxu0 %v336
    %376 = vmatprep.subr.mxu0 0.0
    %377 = vmatpush1.msra.mxu0 0.0
    %378 = vmatprep.subr.mxu0 0.0
    %379 = vmatpush1.msra.mxu0 0.0
    %380 = vmatprep.subr.mxu0 0.0
    %381 = vmatpush1.msra.mxu0 0.0
    %382 = vmatprep.subr.mxu0 0.0
    %383 = vmatpush1.msra.mxu0 0.0
    %384 = vmatprep.subr.mxu0 0.0
    %385 = vmatpush1.msra.mxu0 0.0
    %386 = vmatprep.subr.mxu0 0.0
    %387 = vmatpush1.msra.mxu0 0.0
    %388 = vmatprep.subr.mxu0 0.0
    %389 = vmatpush1.msra.mxu0 0.0
    %390 = vmatprep.subr.mxu0 0.0
    %391 = vmatpush1.msra.mxu0 0.0
    %392 = vmatprep.subr.mxu0 0.0
    %393 = vmatpush1.msra.mxu0 0.0
    %394 = vmatprep.subr.mxu0 0.0
    %395 = vmatpush1.msra.mxu0 0.0
    %396 = vmatprep.subr.mxu0 0.0
    %397 = vmatpush1.msra.mxu0 0.0
    %398 = vmatprep.subr.mxu0 0.0
    %399 = vmatpush1.msra.mxu0 0.0
    %400 = vmatprep.subr.mxu0 0.0
    %401 = vmatpush1.msra.mxu0 0.0
    %402 = vmatprep.subr.mxu0 0.0
    %403 = vmatpush1.msra.mxu0 0.0
    %404 = vmatprep.subr.mxu0 0.0
    %405 = vmatpush1.msra.mxu0 0.0
    %406 = vmatprep.subr.mxu0 0.0
    %407 = vmatpush1.msra.mxu0 0.0
    %408 = vmatprep.mubr.f32.mxu0 0.0
    %409 = vmatmul.mubr.f32.gmra.mrb[0].mxu0 %v320
    %v410 = vpop.f32.mrb[0].mxu0
    %v411 = vadd.f32 %v342, %v410
    %v412 = vpop.f32.mrb[0].mxu0
    %413 = vdwg.mxu0
    %414 = vst.msk [vmem:[#allocation5] sm:$0xff] %vm59, %v411
    // Predicated region
    $region42: #{autoencoder_forward.1} parent=1 // pred_check
      _
    $region43: #{autoencoder_forward.1} parent=1 // pred_check_branch
      %416 = sbr.rel (0) target = $region45
    $region44: #{autoencoder_forward.1} parent=1 // pred_region
      %s418 = ssub.s32 128, 128
      %419 = vsyncadd [#allocation4], %s418
      %s421 = sshll.u32 [#allocation5], 4
      %s422 = int_to_ptr.vmem [resolvable:$true] %s421
      %424 = dma.vmem_to_hbm [thread:$0]  %s422, 128, %s9, [#allocation4]
    $region45: #{autoencoder_forward.1} parent=1 // pred_fallthru
      _
    // Predicated region
    $region46: #{autoencoder_forward.1} parent=1 // pred_check
      _
    $region47: #{autoencoder_forward.1} parent=1 // pred_check_branch
      %426 = sbr.rel (0) target = $region49
    $region48: #{autoencoder_forward.1} parent=1 // pred_region
      %427 = dma.done [#allocation4], 128
    $region49: #{autoencoder_forward.1} parent=1 // pred_fallthru
      _
    %428 = vsyncpa [#allocation3], 1
    %429 = vsyncpa [#allocation4], 1

</llo_original>
